<compile_context>
chip_gen: v5e
topology: v5e:2x2
jax: 0.10.0
libtpu: 0.0.40
codegen_flags: <defaults>
</compile_context>

<pallas_src>
import functools

import jax
import jax.numpy as jnp
from jax.experimental import pallas as pl
from jax.experimental.pallas import tpu as pltpu

IGNORE_INDEX = -100
_TV_TARGET = 4096          # max vocab-chunk width (lanes), multiple of 128
_TM_MAX = 512              # max row tile


def _per_token_nll_kernel(logits_ref, labels_ref, loss_ref,
                          m_ref, l_ref, sel_ref,
                          *, vocab_size, block_v, mask_lanes):
    """Online (streaming) per-token NLL over vocab chunks.

    grid = (row_blocks, vocab_blocks); vocab is the reduction ("arbitrary")
    axis.  Scratch keeps running max (m), running scaled sumexp (l) and the
    gathered raw logit at the label (sel) per row; finalized on the last
    vocab step.  Rows whose label == IGNORE_INDEX (including the garbage rows
    of a partial last row block, whose padded labels are IGNORE_INDEX) are
    zeroed with jnp.where, and garbage vocab-tail lanes are masked with a
    lane-iota compare, so NaN/Inf garbage never leaks into the result.
    """
    j = pl.program_id(1)

    @pl.when(j == 0)
    def _():
        m_ref[...] = jnp.full_like(m_ref, -jnp.inf)
        l_ref[...] = jnp.zeros_like(l_ref)
        sel_ref[...] = jnp.zeros_like(sel_ref)

    chunk = logits_ref[...]                      # (tm, tv) native dtype
    labels = labels_ref[...]                     # (tm, 1)  int32
    tm, tv = chunk.shape

    col = j * block_v + jax.lax.broadcasted_iota(jnp.int32, (tm, tv), 1)

    # Mask out-of-vocab lanes of a partial last vocab chunk (native dtype).
    if mask_lanes:
        neg_inf = jnp.array(-jnp.inf, dtype=chunk.dtype)
        masked = jnp.where(col < vocab_size, chunk, neg_inf)
    else:
        masked = chunk

    # Chunk max in native dtype (exact), then f32 for the running state.
    chunk_max = jnp.max(masked, axis=-1, keepdims=True).astype(jnp.float32)

    # Gather raw logit at label via lane-iota compare (native dtype select;
    # at most one nonzero per row, so the native-dtype sum is exact).
    zero = jnp.zeros((), dtype=chunk.dtype)
    sel_chunk = jnp.sum(jnp.where(col == labels, chunk, zero),
                        axis=-1, keepdims=True).astype(jnp.float32)

    m_old = m_ref[...]
    m_new = jnp.maximum(m_old, chunk_max)
    # Masked lanes are -inf -> exp(-inf - m_new) == 0 exactly.
    p = jnp.exp(masked.astype(jnp.float32) - m_new)
    corr = jnp.exp(m_old - m_new)                # == 0 on the first chunk
    l_ref[...] = corr * l_ref[...] + jnp.sum(p, axis=-1, keepdims=True)
    m_ref[...] = m_new
    sel_ref[...] = sel_ref[...] + sel_chunk

    @pl.when(j == pl.num_programs(1) - 1)
    def _():
        nll = m_ref[...] + jnp.log(l_ref[...]) - sel_ref[...]
        valid = labels != IGNORE_INDEX
        loss_ref[...] = jnp.where(valid, nll, 0.0)


def _round_up(x, m):
    return ((x + m - 1) // m) * m


def _pick_tiles(n, v, itemsize, sublane, tm=None, tv=None):
    """Choose (tm, tv, vmem_budget).

    tv: vocab chunk, full V if small else a 128-multiple capped at _TV_TARGET.
    tm: largest sublane-multiple of rows whose double-buffered native-dtype
        (tm, tv) DMA + ~one f32 working copy + per-row (tm,1) scratch fits the
        per-chip VMEM budget.  Sublane rounding happens inside the budget.
    """
    if tv is None:
        tv = v if v <= _TV_TARGET else _TV_TARGET

    try:
        cap = int(getattr(pltpu.get_tpu_info(), "vmem_capacity_bytes"))
    except Exception:
        cap = 64 * 1024 * 1024                   # conservative (v7x per-core)
    # 96 MiB on 128-MiB chips (v5e/v6e), 48 MiB on 64-MiB chips (v7x).
    budget = max(16 * 1024 * 1024, min(96 * 1024 * 1024, (cap * 3) // 4))

    if tm is None:
        # Per row: 2 double-buffered native-dtype DMA copies of the (·, tv)
        # slab, ~1 f32 working copy (Mosaic streams the rest through vregs),
        # plus lane-padded (tm,1) labels/out/scratch blocks (~4 KiB/row).
        per_row = tv * (2 * itemsize + 4) + 4 * 1024
        tm_fit = ((budget // per_row) // sublane) * sublane   # rounded in-budget
        tm = min(_TM_MAX, max(sublane, tm_fit))
    else:
        tm = max(sublane, (int(tm) // sublane) * sublane)

    tm = min(tm, _round_up(n, sublane))
    tm = max(tm, sublane)
    return int(tm), int(tv), int(budget)


def per_token_nll(logits_2d, labels_1d, *, tm=None, tv=None):
    """logits_2d: (N, V) float (any dtype), labels_1d: (N,) int -> (N,) f32 NLL.

    Ignored rows (label == IGNORE_INDEX) produce 0.0.
    """
    n, v = logits_2d.shape
    itemsize = jnp.dtype(logits_2d.dtype).itemsize
    sublane = {4: 8, 2: 16, 1: 32}.get(itemsize, 8)

    tm, tv, vmem_budget = _pick_tiles(n, v, itemsize, sublane, tm, tv)

    grid_m = pl.cdiv(n, tm)
    grid_v = pl.cdiv(v, tv)
    n_pad = grid_m * tm
    mask_lanes = (v % tv) != 0

    labels_2d = labels_1d.astype(jnp.int32)[:, None]             # (N, 1)
    if n_pad != n:
        # Only the tiny (N, 1) labels get padded; the big logits stay untouched
        # in HBM and the partial last row block is masked in-kernel.
        labels_2d = jnp.pad(labels_2d, ((0, n_pad - n), (0, 0)),
                            constant_values=IGNORE_INDEX)

    kernel = functools.partial(_per_token_nll_kernel,
                               vocab_size=v, block_v=tv, mask_lanes=mask_lanes)

    out = pl.pallas_call(
        kernel,
        out_shape=jax.ShapeDtypeStruct((n_pad, 1), jnp.float32),
        grid_spec=pltpu.PrefetchScalarGridSpec(
            num_scalar_prefetch=0,
            grid=(grid_m, grid_v),
            in_specs=[pl.BlockSpec((tm, tv), lambda i, j: (i, j)),
                      pl.BlockSpec((tm, 1), lambda i, j: (i, 0))],
            out_specs=pl.BlockSpec((tm, 1), lambda i, j: (i, 0)),
            scratch_shapes=[pltpu.VMEM((tm, 1), jnp.float32),   # running max
                            pltpu.VMEM((tm, 1), jnp.float32),   # running sumexp
                            pltpu.VMEM((tm, 1), jnp.float32)],  # gathered logit
        ),
        compiler_params=pltpu.CompilerParams(
            dimension_semantics=("parallel", "arbitrary"),
            vmem_limit_bytes=int(vmem_budget)),
    )(logits_2d, labels_2d)
    return out[:n, 0]


def dmk_loss(logits, labels, keyword_mask, alpha=0.5, *, tm=None, tv=None):
    """DMKLoss.forward.

    logits:       (B, T, V) float (kept in its native dtype for the DMA)
    labels:       (B, T)    int  (IGNORE_INDEX = -100 means "ignore")
    keyword_mask: (B, T)    bool
    """
    v = logits.shape[-1]
    logits_2d = logits.reshape(-1, v)
    labels_flat = labels.reshape(-1).astype(jnp.int32)
    nll = per_token_nll(logits_2d, labels_flat, tm=tm, tv=tv)    # (N,), 0 if ignored

    valid = (labels_flat != IGNORE_INDEX).astype(jnp.float32)
    kw = keyword_mask.reshape(-1).astype(jnp.float32)

    # CrossEntropyLoss(ignore_index=-100, reduction='mean') over all tokens.
    ce_loss = jnp.sum(nll) / jnp.sum(valid)

    # keyword_logits = logits[keyword_mask]; empty selection -> keyword_loss = 0.
    # NOTE: if keyword tokens exist but are all ignore_index this is 0/0 = NaN,
    # matching torch.nn.CrossEntropyLoss(reduction='mean') semantics.
    kw_count = jnp.sum(kw)
    kw_valid_count = jnp.sum(kw * valid)
    keyword_loss = jnp.where(kw_count == 0, 0.0,
                             jnp.sum(nll * kw) / kw_valid_count)

    return alpha * ce_loss + (1.0 - alpha) * keyword_loss


if __name__ == "__main__":
    def reference(logits, labels, keyword_mask, alpha):
        logits = logits.astype(jnp.float32)
        logp = jax.nn.log_softmax(logits, axis=-1).reshape(-1, logits.shape[-1])
        lbl = labels.reshape(-1)
        valid = lbl != IGNORE_INDEX
        safe = jnp.where(valid, lbl, 0)
        nll = -jnp.take_along_axis(logp, safe[:, None], axis=-1)[:, 0]
        nll = jnp.where(valid, nll, 0.0)
        ce = nll.sum() / valid.sum()
        kwf = keyword_mask.reshape(-1)
        kw_cnt = kwf.sum()
        kw_loss = jnp.where(kw_cnt == 0, 0.0,
                            (nll * kwf).sum() / (kwf & valid).sum())
        return alpha * ce + (1.0 - alpha) * kw_loss

    # --- case 1: small shapes, auto tiles (single block in both dims) ------
    key = jax.random.PRNGKey(0)
    B, T, V = 2, 8, 32
    k1, k2, k3 = jax.random.split(key, 3)
    logits = jax.random.normal(k1, (B, T, V), jnp.float32)
    labels = jax.random.randint(k2, (B, T), 0, V, dtype=jnp.int32)
    labels = labels.at[0, 0].set(IGNORE_INDEX)           # some ignored tokens
    keyword_mask = jax.random.bernoulli(k3, 0.4, (B, T))

    out = jax.block_until_ready(dmk_loss(logits, labels, keyword_mask, alpha=0.5))
    ref = reference(logits, labels, keyword_mask, 0.5)
    assert jnp.allclose(out, ref, atol=1e-4, rtol=1e-4), (out, ref)

    # --- case 2: forced small tiles -> 2-D grid (3 row blocks x 3 vocab
    #             chunks), online logsumexp across chunks + partial last row
    #             block masked via IGNORE_INDEX-padded labels ----------------
    B2, T2, V2 = 2, 37, 384                               # N = 74
    k4, k5, k6 = jax.random.split(jax.random.PRNGKey(1), 3)
    logits2 = jax.random.normal(k4, (B2, T2, V2), jnp.float32)
    labels2 = jax.random.randint(k5, (B2, T2), 0, V2, dtype=jnp.int32)
    labels2 = labels2.at[1, 5].set(IGNORE_INDEX)
    keyword_mask2 = jax.random.bernoulli(k6, 0.3, (B2, T2))

    out2 = jax.block_until_ready(
        dmk_loss(logits2, labels2, keyword_mask2, alpha=0.3, tm=32, tv=128))
    ref2 = reference(logits2, labels2, keyword_mask2, 0.3)
    assert jnp.allclose(out2, ref2, atol=1e-4, rtol=1e-4), (out2, ref2)

    # --- case 3: bf16 logits, V not a multiple of the vocab chunk ->
    #             partial last vocab chunk masked by the lane-iota mask,
    #             partial last row block masked by padded labels -------------
    B3, T3, V3 = 2, 19, 200                               # N = 38
    k7, k8, k9 = jax.random.split(jax.random.PRNGKey(2), 3)
    logits3 = jax.random.normal(k7, (B3, T3, V3), jnp.float32).astype(jnp.bfloat16)
    labels3 = jax.random.randint(k8, (B3, T3), 0, V3, dtype=jnp.int32)
    labels3 = labels3.at[0, 3].set(IGNORE_INDEX)
    keyword_mask3 = jax.random.bernoulli(k9, 0.5, (B3, T3))

    out3 = jax.block_until_ready(
        dmk_loss(logits3, labels3, keyword_mask3, alpha=0.7, tm=16, tv=128))
    ref3 = reference(logits3, labels3, keyword_mask3, 0.7)
    assert jnp.allclose(out3, ref3, atol=1e-3, rtol=1e-3), (out3, ref3)

    print("KERNEL_OK")
</pallas_src>

<mosaic_0001>
module attributes {stable_mosaic.version = 11 : i64} {
  func.func @_per_token_nll_kernel(%arg0: i32, %arg1: i32, %arg2: memref<16x32xf32, #tpu.memory_space<vmem>>, %arg3: memref<16x1xi32, #tpu.memory_space<vmem>>, %arg4: memref<16x1xf32, #tpu.memory_space<vmem>>, %arg5: memref<16x1xf32, #tpu.memory_space<vmem>>, %arg6: memref<16x1xf32, #tpu.memory_space<vmem>>, %arg7: memref<16x1xf32, #tpu.memory_space<vmem>>) attributes {dimension_semantics = [#tpu.dimension_semantics<parallel>, #tpu.dimension_semantics<arbitrary>], iteration_bounds = array<i64: 1, 1>, scalar_prefetch = 0 : i64, scratch_operands = 3 : i64, tpu.core_type = #tpu.core_type<tc>, window_params = [{transform_indices = @transform_0, window_bounds = array<i64: 16, 32>}, {transform_indices = @transform_1, window_bounds = array<i64: 16, 1>}, {transform_indices = @transform_2, window_bounds = array<i64: 16, 1>}]} {
    %c0_i32 = arith.constant 0 : i32
    %0 = arith.cmpi eq, %arg1, %c0_i32 : i32
    %1 = arith.extui %0 : i1 to i32
    %c0_i32_0 = arith.constant 0 : i32
    %2 = arith.cmpi ne, %1, %c0_i32_0 : i32
    scf.if %2 {
      %cst_21 = arith.constant 0xFF800000 : f32
      %37 = vector.broadcast %cst_21 : f32 to vector<16x1xf32>
      %c0_22 = arith.constant 0 : index
      %c0_23 = arith.constant 0 : index
      %38 = vector.load %arg5[%c0_22, %c0_23] : memref<16x1xf32, #tpu.memory_space<vmem>>, vector<16x1xf32>
      tpu.vector_store %arg5[%c0_22, %c0_23], %37 {strides = array<i32>} : memref<16x1xf32, #tpu.memory_space<vmem>>, vector<16x1xf32>,
      %cst_24 = arith.constant 0.000000e+00 : f32
      %39 = vector.broadcast %cst_24 : f32 to vector<16x1xf32>
      %c0_25 = arith.constant 0 : index
      %c0_26 = arith.constant 0 : index
      %40 = vector.load %arg6[%c0_25, %c0_26] : memref<16x1xf32, #tpu.memory_space<vmem>>, vector<16x1xf32>
      tpu.vector_store %arg6[%c0_25, %c0_26], %39 {strides = array<i32>} : memref<16x1xf32, #tpu.memory_space<vmem>>, vector<16x1xf32>,
      %cst_27 = arith.constant 0.000000e+00 : f32
      %41 = vector.broadcast %cst_27 : f32 to vector<16x1xf32>
      %c0_28 = arith.constant 0 : index
      %c0_29 = arith.constant 0 : index
      %42 = vector.load %arg7[%c0_28, %c0_29] : memref<16x1xf32, #tpu.memory_space<vmem>>, vector<16x1xf32>
      tpu.vector_store %arg7[%c0_28, %c0_29], %41 {strides = array<i32>} : memref<16x1xf32, #tpu.memory_space<vmem>>, vector<16x1xf32>,
    } else {
    }
    %c0 = arith.constant 0 : index
    %c0_1 = arith.constant 0 : index
    %3 = vector.load %arg2[%c0, %c0_1] : memref<16x32xf32, #tpu.memory_space<vmem>>, vector<16x32xf32>
    %c0_2 = arith.constant 0 : index
    %c0_3 = arith.constant 0 : index
    %4 = vector.load %arg3[%c0_2, %c0_3] : memref<16x1xi32, #tpu.memory_space<vmem>>, vector<16x1xi32>
    %c32_i32 = arith.constant 32 : i32
    %5 = arith.muli %arg1, %c32_i32 : i32
    %6 = tpu.iota {dimensions = array<i32: 1>} : vector<16x32xi32>
    %7 = vector.broadcast %5 : i32 to vector<16x32xi32>
    %8 = arith.addi %7, %6 : vector<16x32xi32>
    %cst = arith.constant dense<0xFF800000> : vector<16xf32>
    %9 = vector.multi_reduction <maximumf>, %3, %cst [1] : vector<16x32xf32> to vector<16xf32>
    %10 = vector.shape_cast %9 : vector<16xf32> to vector<16x1xf32>
    %11 = vector.broadcast %4 : vector<16x1xi32> to vector<16x32xi32>
    %12 = arith.cmpi eq, %8, %11 : vector<16x32xi32>
    %cst_4 = arith.constant 0.000000e+00 : f32
    %13 = vector.broadcast %cst_4 : f32 to vector<16x32xf32>
    %14 = arith.select %12, %3, %13 : vector<16x32xi1>, vector<16x32xf32>
    %cst_5 = arith.constant dense<0.000000e+00> : vector<16xf32>
    %15 = vector.multi_reduction <add>, %14, %cst_5 [1] : vector<16x32xf32> to vector<16xf32>
    %16 = vector.shape_cast %15 : vector<16xf32> to vector<16x1xf32>
    %c0_6 = arith.constant 0 : index
    %c0_7 = arith.constant 0 : index
    %17 = vector.load %arg5[%c0_6, %c0_7] : memref<16x1xf32, #tpu.memory_space<vmem>>, vector<16x1xf32>
    %18 = arith.maximumf %17, %10 : vector<16x1xf32>
    %19 = vector.broadcast %18 : vector<16x1xf32> to vector<16x32xf32>
    %20 = arith.subf %3, %19 : vector<16x32xf32>
    %21 = math.exp %20 : vector<16x32xf32>
    %22 = arith.subf %17, %18 : vector<16x1xf32>
    %23 = math.exp %22 : vector<16x1xf32>
    %c0_8 = arith.constant 0 : index
    %c0_9 = arith.constant 0 : index
    %24 = vector.load %arg6[%c0_8, %c0_9] : memref<16x1xf32, #tpu.memory_space<vmem>>, vector<16x1xf32>
    %25 = arith.mulf %23, %24 : vector<16x1xf32>
    %cst_10 = arith.constant dense<0.000000e+00> : vector<16xf32>
    %26 = vector.multi_reduction <add>, %21, %cst_10 [1] : vector<16x32xf32> to vector<16xf32>
    %27 = vector.shape_cast %26 : vector<16xf32> to vector<16x1xf32>
    %28 = arith.addf %25, %27 : vector<16x1xf32>
    %c0_11 = arith.constant 0 : index
    %c0_12 = arith.constant 0 : index
    %29 = vector.load %arg6[%c0_11, %c0_12] : memref<16x1xf32, #tpu.memory_space<vmem>>, vector<16x1xf32>
    tpu.vector_store %arg6[%c0_11, %c0_12], %28 {strides = array<i32>} : memref<16x1xf32, #tpu.memory_space<vmem>>, vector<16x1xf32>,
    %c0_13 = arith.constant 0 : index
    %c0_14 = arith.constant 0 : index
    %30 = vector.load %arg5[%c0_13, %c0_14] : memref<16x1xf32, #tpu.memory_space<vmem>>, vector<16x1xf32>
    tpu.vector_store %arg5[%c0_13, %c0_14], %18 {strides = array<i32>} : memref<16x1xf32, #tpu.memory_space<vmem>>, vector<16x1xf32>,
    %c0_15 = arith.constant 0 : index
    %c0_16 = arith.constant 0 : index
    %31 = vector.load %arg7[%c0_15, %c0_16] : memref<16x1xf32, #tpu.memory_space<vmem>>, vector<16x1xf32>
    %32 = arith.addf %31, %16 : vector<16x1xf32>
    %c0_17 = arith.constant 0 : index
    %c0_18 = arith.constant 0 : index
    %33 = vector.load %arg7[%c0_17, %c0_18] : memref<16x1xf32, #tpu.memory_space<vmem>>, vector<16x1xf32>
    tpu.vector_store %arg7[%c0_17, %c0_18], %32 {strides = array<i32>} : memref<16x1xf32, #tpu.memory_space<vmem>>, vector<16x1xf32>,
    %c0_i32_19 = arith.constant 0 : i32
    %34 = arith.cmpi eq, %arg1, %c0_i32_19 : i32
    %35 = arith.extui %34 : i1 to i32
    %c0_i32_20 = arith.constant 0 : i32
    %36 = arith.cmpi ne, %35, %c0_i32_20 : i32
    scf.if %36 {
      %c0_21 = arith.constant 0 : index
      %c0_22 = arith.constant 0 : index
      %37 = vector.load %arg5[%c0_21, %c0_22] : memref<16x1xf32, #tpu.memory_space<vmem>>, vector<16x1xf32>
      %c0_23 = arith.constant 0 : index
      %c0_24 = arith.constant 0 : index
      %38 = vector.load %arg6[%c0_23, %c0_24] : memref<16x1xf32, #tpu.memory_space<vmem>>, vector<16x1xf32>
      %39 = math.log %38 : vector<16x1xf32>
      %40 = arith.addf %37, %39 : vector<16x1xf32>
      %c0_25 = arith.constant 0 : index
      %c0_26 = arith.constant 0 : index
      %41 = vector.load %arg7[%c0_25, %c0_26] : memref<16x1xf32, #tpu.memory_space<vmem>>, vector<16x1xf32>
      %42 = arith.subf %40, %41 : vector<16x1xf32>
      %c-100_i32 = arith.constant -100 : i32
      %43 = vector.broadcast %c-100_i32 : i32 to vector<16x1xi32>
      %44 = arith.cmpi ne, %4, %43 : vector<16x1xi32>
      %cst_27 = arith.constant 0.000000e+00 : f32
      %45 = vector.broadcast %cst_27 : f32 to vector<16x1xf32>
      %46 = arith.select %44, %42, %45 : vector<16x1xi1>, vector<16x1xf32>
      %c0_28 = arith.constant 0 : index
      %c0_29 = arith.constant 0 : index
      %47 = vector.load %arg4[%c0_28, %c0_29] : memref<16x1xf32, #tpu.memory_space<vmem>>, vector<16x1xf32>
      tpu.vector_store %arg4[%c0_28, %c0_29], %46 {strides = array<i32>} : memref<16x1xf32, #tpu.memory_space<vmem>>, vector<16x1xf32>,
    } else {
    }
    return
  }
  func.func @transform_0(%arg0: i32, %arg1: i32) -> (i32, i32) {
    %c0_i32 = arith.constant 0 : i32
    return %arg0, %arg1 : i32, i32
  }
  func.func @transform_1(%arg0: i32, %arg1: i32) -> (i32, i32) {
    %c0_i32 = arith.constant 0 : i32
    %c0_i32_0 = arith.constant 0 : i32
    return %arg0, %c0_i32 : i32, i32
  }
  func.func @transform_2(%arg0: i32, %arg1: i32) -> (i32, i32) {
    %c0_i32 = arith.constant 0 : i32
    %c0_i32_0 = arith.constant 0 : i32
    return %arg0, %c0_i32 : i32, i32
  }
}

</mosaic_0001>

<llo_original>
// kernel: tpu_custom_call.1
$region0: #{tpu_custom_call.1}
  #allocation0 [shape = 'u32[]', space=smem, size = 0x4, offset = 0x4, fixed_abs, tag = 'smem constant byte address 0x4 - core index']
  #allocation1 [shape = 'u32[72,128]{1,0:T(1,128)}', space=vmem, size = 0x9000, scoped, tag = 'internal scratch']
  #allocation2 [shape = 'f32[16,1]{1,0:T(8,128)}', space=vmem, size = 0x2000, scoped, tag = 'scratch operand']
  #allocation3 [shape = 'f32[16,1]{1,0:T(8,128)}', space=vmem, size = 0x2000, scoped, tag = 'scratch operand']
  #allocation4 [shape = 'f32[16,1]{1,0:T(8,128)}', space=vmem, size = 0x2000, scoped, tag = 'scratch operand']
  %s0 = inlined_call_operand.vmem [shape: f32[16,32], index: 0, kind: input, shape index: {}]
  %s1 = inlined_call_operand.vmem [shape: s32[16,1], index: 1, kind: input, shape index: {}]
  %s2 = inlined_call_operand.vmem [shape: f32[16,1], index: 2, kind: output, shape index: {}]
  %s3 = sld [smem:[#allocation0]]
  $region26: #{tpu_custom_call.1} parent=0
    _
  %s5 = ssub.s32 1, %s3
  %s6 = scalar_select 0, %s5, %s3
  // Predicated region
  $region2: #{tpu_custom_call.1} parent=0 // pred_check
    _
  $region3: #{tpu_custom_call.1} parent=0 // pred_check_branch
    %8 = sbr.rel (0) target = $region5
  $region4: #{tpu_custom_call.1} parent=0 // pred_region
    _
  $region5: #{tpu_custom_call.1} parent=0 // pred_fallthru
    _
  // Predicated region
  $region6: #{tpu_custom_call.1} parent=0 // pred_check
    _
  $region7: #{tpu_custom_call.1} parent=0 // pred_check_branch
    %10 = sbr.rel (0) target = $region9
  $region8: #{tpu_custom_call.1} parent=0 // pred_region
    _
  $region9: #{tpu_custom_call.1} parent=0 // pred_fallthru
    _
  %p11 = scmp.eq.s32.totalorder 0, 0
  // Predicated region
  $region10: #{tpu_custom_call.1} parent=0 // pred_check
    %p12 = pneg %p11
  $region11: #{tpu_custom_call.1} parent=0 // pred_check_branch
    %14 = sbr.rel (%p12) target = $region13
  $region12: #{tpu_custom_call.1} parent=0 // pred_region
    %vm15 = vcmask 7168
    %16 = vst.msk [vmem:[#allocation2] sm:$0xff] %vm15, -inf
    %17 = vst.msk [vmem:[#allocation2 + $0x8] sm:$0xff] %vm15, -inf
    %18 = vst.msk [vmem:[#allocation3] sm:$0xff] %vm15, 0.0
    %19 = vst.msk [vmem:[#allocation3 + $0x8] sm:$0xff] %vm15, 0.0
    %20 = vst.msk [vmem:[#allocation4] sm:$0xff] %vm15, 0.0
    %21 = vst.msk [vmem:[#allocation4 + $0x8] sm:$0xff] %vm15, 0.0
  $region13: #{tpu_custom_call.1} parent=0 // pred_fallthru
    _
  %v22 = vld [vmem:[%s0] sm:$0xff]
  %v23 = vld [vmem:[%s0 + $0x8] sm:$0xff]
  %v24 = vld [vmem:[%s1] sm:$0xff]
  %v25 = vld [vmem:[%s1 + $0x8] sm:$0xff]
  %s26 = smul.u32 0, 32
  %v27 = vlaneseq
  %v28 = vand.u32 %v27, 127
  %v29 = vstv %s26
  %v30 = vadd.s32 %v29, %v28
  %vm31 = vcmask 261120
  %v32 = vsel %vm31, %v22, -inf
  %33 = vmax.xlane.f32.xlu0 %v32
  %v34 = vpop.xlane.xlu0 %33
  %v35 = vsel %vm31, %v23, -inf
  %36 = vmax.xlane.f32.xlu0 %v35
  %v37 = vpop.xlane.xlu0 %36
  %38 = vset.pattern.permute.xlu0 0
  %39 = vperm.xlu0 %38, %v24
  %v40 = vpop.permute.xlu0 %39
  %41 = vset.pattern.permute.xlu0 0
  %42 = vperm.xlu0 %41, %v25
  %v43 = vpop.permute.xlu0 %42
  %vm44 = vcmp.eq.s32.totalorder %v30, %v40
  %vm45 = vcmp.eq.s32.totalorder %v30, %v43
  %v46 = vsel %vm44, %v22, 0.0
  %v47 = vsel %vm45, %v23, 0.0
  %v48 = vsel %vm31, %v46, 0.0
  %49 = vadd.xlane.f32.xlu0 %v48
  %v50 = vpop.xlane.xlu0 %49
  %v51 = vsel %vm31, %v47, 0.0
  %52 = vadd.xlane.f32.xlu0 %v51
  %v53 = vpop.xlane.xlu0 %52
  %v54 = vld [vmem:[#allocation2] sm:$0xff]
  %v55 = vld [vmem:[#allocation2 + $0x8] sm:$0xff]
  %v56 = vmax.f32 %v54, %v34
  %v57 = vmax.f32 %v55, %v37
  %59 = vset.pattern.permute.xlu0 0
  %60 = vperm.xlu0 %59, %v56
  %v61 = vpop.permute.xlu0 %60
  %64 = vset.pattern.permute.xlu0 0
  %65 = vperm.xlu0 %64, %v57
  %v66 = vpop.permute.xlu0 %65
  %v68 = vsub.f32 %v22, %v61
  %v69 = vsub.f32 %v23, %v66
  %v70 = vmul.f32 %v68, 1.442695
  %v71 = vpow.pop %v70
  %v72 = vmul.f32 %v69, 1.442695
  %v73 = vpow.pop %v72
  %v74 = vsub.f32 %v54, %v56
  %v75 = vsub.f32 %v55, %v57
  %v76 = vmul.f32 %v74, 1.442695
  %v77 = vpow.pop %v76
  %v78 = vmul.f32 %v75, 1.442695
  %v79 = vpow.pop %v78
  %v80 = vld [vmem:[#allocation3] sm:$0xff]
  %v81 = vld [vmem:[#allocation3 + $0x8] sm:$0xff]
  %v82 = vmul.f32 %v77, %v80
  %v83 = vmul.f32 %v79, %v81
  %v84 = vsel %vm31, %v71, 0.0
  %85 = vadd.xlane.f32.xlu0 %v84
  %v86 = vpop.xlane.xlu0 %85
  %v87 = vsel %vm31, %v73, 0.0
  %88 = vadd.xlane.f32.xlu0 %v87
  %v89 = vpop.xlane.xlu0 %88
  %v90 = vadd.f32 %v82, %v86
  %v91 = vadd.f32 %v83, %v89
  %vm92 = vcmask 7168
  %93 = vst.msk [vmem:[#allocation3] sm:$0xff] %vm92, %v90
  %94 = vst.msk [vmem:[#allocation3 + $0x8] sm:$0xff] %vm92, %v91
  %95 = vst.msk [vmem:[#allocation2] sm:$0xff] %vm92, %v56
  %96 = vst.msk [vmem:[#allocation2 + $0x8] sm:$0xff] %vm92, %v57
  %v97 = vld [vmem:[#allocation4] sm:$0xff]
  %v98 = vld [vmem:[#allocation4 + $0x8] sm:$0xff]
  %v99 = vadd.f32 %v97, %v50
  %v100 = vadd.f32 %v98, %v53
  %101 = vst.msk [vmem:[#allocation4] sm:$0xff] %vm92, %v99
  %102 = vst.msk [vmem:[#allocation4 + $0x8] sm:$0xff] %vm92, %v100
  // Predicated region
  $region14: #{tpu_custom_call.1} parent=0 // pred_check
    %p103 = pneg %p11
  $region15: #{tpu_custom_call.1} parent=0 // pred_check_branch
    %105 = sbr.rel (%p103) target = $region17
  $region16: #{tpu_custom_call.1} parent=0 // pred_region
    %v106 = vld [vmem:[#allocation2] sm:$0xff]
    %v107 = vld [vmem:[#allocation2 + $0x8] sm:$0xff]
    %v108 = vld [vmem:[#allocation3] sm:$0xff]
    %v109 = vld [vmem:[#allocation3 + $0x8] sm:$0xff]
    %v110 = vlog2.pop %v108
    %v111 = vmul.f32 %v110, 0.6931472
    %v112 = vlog2.pop %v109
    %v113 = vmul.f32 %v112, 0.6931472
    %v114 = vadd.f32 %v106, %v111
    %v115 = vadd.f32 %v107, %v113
    %v116 = vld [vmem:[#allocation4] sm:$0xff]
    %v117 = vld [vmem:[#allocation4 + $0x8] sm:$0xff]
    %v118 = vsub.f32 %v114, %v116
    %v119 = vsub.f32 %v115, %v117
    %vm120 = vcmp.ne.s32.totalorder %v24, 4294967196
    %vm121 = vcmp.ne.s32.totalorder %v25, 4294967196
    %v122 = vsel %vm120, %v118, 0.0
    %v123 = vsel %vm121, %v119, 0.0
    %124 = vst.msk [vmem:[%s2] sm:$0xff] %vm92, %v122
    %125 = vst.msk [vmem:[%s2 + $0x8] sm:$0xff] %vm92, %v123
  $region17: #{tpu_custom_call.1} parent=0 // pred_fallthru
    _
  // Predicated region
  $region18: #{tpu_custom_call.1} parent=0 // pred_check
    _
  $region19: #{tpu_custom_call.1} parent=0 // pred_check_branch
    %127 = sbr.rel (0) target = $region21
  $region20: #{tpu_custom_call.1} parent=0 // pred_region
    _
  $region21: #{tpu_custom_call.1} parent=0 // pred_fallthru
    _
  // Predicated region
  $region22: #{tpu_custom_call.1} parent=0 // pred_check
    _
  $region23: #{tpu_custom_call.1} parent=0 // pred_check_branch
    %129 = sbr.rel (0) target = $region25
  $region24: #{tpu_custom_call.1} parent=0 // pred_region
    _
  $region25: #{tpu_custom_call.1} parent=0 // pred_fallthru
    _

</llo_original>
